<compile_context>
chip_gen: v5e
topology: v5e:2x2
jax: 0.10.0
libtpu: 0.0.40
codegen_flags: <defaults>
</compile_context>

<pallas_src>
import functools

import jax
import jax.numpy as jnp
from jax.experimental import pallas as pl
from jax.experimental.pallas import tpu as pltpu

_LANE = 128
_SUBLANE = 8


def _vmem_budgets():
    """(row-tile working-set budget, vmem_limit_bytes) for this TPU generation."""
    try:
        vmem = int(pltpu.get_tpu_info().vmem_capacity_bytes)
    except Exception:  # pragma: no cover - be conservative if the query fails
        vmem = 64 * 1024 * 1024
    if vmem >= 128 * 1024 * 1024:
        # v5e / v6e: 128 MiB VMEM per TensorCore -> use it.
        return 48 * 1024 * 1024, 100 * 1024 * 1024
    # v7x: 64 MiB per TensorCore -> leave headroom.
    return 24 * 1024 * 1024, 48 * 1024 * 1024


def _row_tile(n_rows, bytes_per_row_buffered, budget_bytes, reserved_bytes=0,
              max_rows=2048):
    """Largest row tile (multiple of 8) whose buffered bytes fit the budget.

    `bytes_per_row_buffered` must already include the 2x double-buffering factor
    for every *streamed* array; `reserved_bytes` accounts for resident operands
    / scratch that Pallas also keeps in VMEM.
    """
    avail = max(budget_bytes - reserved_bytes, 2 * 1024 * 1024)
    tile = max(_SUBLANE, avail // max(bytes_per_row_buffered, 1))
    tile = min(tile, max_rows, n_rows)
    if tile >= n_rows:
        return n_rows  # full array dim is always a legal block dim
    return max(_SUBLANE, (tile // _SUBLANE) * _SUBLANE)


# ---------------------------------------------------------------------------
# Kernels
# ---------------------------------------------------------------------------
def _mean_center_kernel(x_ref, o_ref, sum_ref, *, total_rows, block_rows):
    """Fused column-mean + centering.

    grid = (2, n_row_tiles); phase axis first (sequential), row tiles second.
      phase 0: accumulate masked column sums into the (1, D) f32 scratch,
               convert to the mean on the last row tile.
      phase 1: stream X again, subtract the mean, write Xc.
    """
    p = pl.program_id(0)
    i = pl.program_id(1)

    @pl.when((p == 0) & (i == 0))
    def _():
        sum_ref[...] = jnp.zeros_like(sum_ref)

    @pl.when(p == 0)
    def _():
        x = x_ref[...].astype(jnp.float32)  # accumulate in f32 even for bf16 in
        # Mask rows of the (possibly ragged) final block with a select so that
        # padding (even NaN garbage) never contaminates the global column sum.
        row_ids = i * block_rows + jax.lax.broadcasted_iota(jnp.int32, x.shape, 0)
        x = jnp.where(row_ids < total_rows, x, 0.0)
        sum_ref[...] += jnp.sum(x, axis=0, keepdims=True)

    @pl.when((p == 0) & (i == pl.num_programs(1) - 1))
    def _():
        sum_ref[...] = sum_ref[...] * (1.0 / total_rows)  # scratch now holds mean

    @pl.when(p == 1)
    def _():
        # Ragged last tile: out-of-bounds output rows are discarded by Pallas.
        o_ref[...] = (x_ref[...].astype(jnp.float32) - sum_ref[...]).astype(o_ref.dtype)


def _project_kernel(x_ref, u_ref, o_ref):
    o_ref[...] = jnp.dot(
        x_ref[...], u_ref[...], preferred_element_type=jnp.float32
    ).astype(o_ref.dtype)


# ---------------------------------------------------------------------------
# Wrappers
# ---------------------------------------------------------------------------
def mean_center(X, out_dtype=None):
    """Fused (exact) column-mean + centering: returns Xc = X - mean(X, 0)."""
    N, D = X.shape
    out_dtype = X.dtype if out_dtype is None else jnp.dtype(out_dtype)
    budget, vmem_limit = _vmem_budgets()
    # Streamed per step: X tile in + Xc tile out, each double-buffered.
    per_row = 2 * D * (X.dtype.itemsize + jnp.dtype(out_dtype).itemsize)
    tile = _row_tile(N, per_row, budget, reserved_bytes=4 * D)
    grid = (2, pl.cdiv(N, tile))

    return pl.pallas_call(
        functools.partial(_mean_center_kernel, total_rows=N, block_rows=tile),
        out_shape=jax.ShapeDtypeStruct((N, D), out_dtype),
        grid=grid,
        in_specs=[pl.BlockSpec((tile, D), lambda p, i: (i, 0))],
        # Phase 0 parks the output window on block 0 (never written, overwritten
        # by phase 1 before any writeback); phase 1 streams block i.
        out_specs=pl.BlockSpec((tile, D), lambda p, i: (i * p, 0)),
        scratch_shapes=[pltpu.VMEM((1, D), jnp.float32)],
        compiler_params=pltpu.CompilerParams(
            # Both axes sequential: the scratch accumulator must be shared across
            # all row tiles, so the row axis cannot be megacore-sharded.
            dimension_semantics=("arbitrary", "arbitrary"),
            vmem_limit_bytes=vmem_limit,
        ),
    )(X)


def project(Xc, Uk):
    """Optional torch-style projection C = Xc @ Uk on the MXU (row-tiled)."""
    N, D = Xc.shape
    _, k = Uk.shape
    budget, vmem_limit = _vmem_budgets()

    if k >= _LANE:
        # Lane-dense output: pad to a multiple of 128 for unmasked vst's.
        k_out = ((k + _LANE - 1) // _LANE) * _LANE
        Uk_in = Uk if k_out == k else jnp.zeros((D, k_out), Uk.dtype).at[:, :k].set(Uk)
    else:
        # Small num_pca: emit (N, k) directly — masked stores are far cheaper
        # than 4-16x padded write amplification plus a follow-up slice kernel.
        k_out, Uk_in = k, Uk

    # Account for the resident (double-buffered) Uk block in the VMEM budget.
    # TODO(synk): for very large D (>~8K) on v7x, tile the contraction dim with
    #             an "arbitrary" K grid axis + f32 accumulator instead.
    reserved = 2 * D * k_out * Uk_in.dtype.itemsize
    per_row = 2 * (D * Xc.dtype.itemsize + k_out * Xc.dtype.itemsize)
    tile = _row_tile(N, per_row, budget, reserved_bytes=reserved)
    grid = (pl.cdiv(N, tile),)

    C_out = pl.pallas_call(
        _project_kernel,
        out_shape=jax.ShapeDtypeStruct((N, k_out), Xc.dtype),
        grid=grid,
        in_specs=[
            pl.BlockSpec((tile, D), lambda i: (i, 0)),
            pl.BlockSpec((D, k_out), lambda i: (0, 0)),  # Uk resident across grid
        ],
        out_specs=pl.BlockSpec((tile, k_out), lambda i: (i, 0)),
        compiler_params=pltpu.CompilerParams(
            dimension_semantics=("parallel",),  # megacore sharding on v7x
            vmem_limit_bytes=vmem_limit,
        ),
    )(Xc, Uk_in)
    return C_out if k_out == k else C_out[:, :k]


def mypca_forward(X, num_pca, *, use_projection_kernel=False, matmul_dtype=None):
    """Pallas implementation of MYPCA.forward.

    Default path avoids the explicit projection: with Xc = U diag(S) Vh,
    torch's C = Xc @ (left singular vectors of Xc^T)[:, :k] equals U[:,:k]*S[:k].
    Set use_projection_kernel=True for the explicit MXU projection (optionally
    in bf16 via matmul_dtype=jnp.bfloat16, f32-accumulated).
    """
    X = jnp.asarray(X)

    # 1) Exact mean + centering, fused into one gridded Pallas kernel.
    Xc = mean_center(X)

    # 2) SVD of Xc (no materialized transpose).  The basis is computed in f32
    #    even for bf16 inputs.
    # TODO(synk): SVD is an iterative LAPACK-style algorithm with no clean
    #             Pallas equivalent; computed with jnp.linalg.svd in plain JAX.
    U, S, Vh = jnp.linalg.svd(Xc.astype(jnp.float32), full_matrices=False)

    if use_projection_kernel:
        # torch-style: U_t (left sing. vecs of Xc^T) == Vh.T, C = Xc @ U_t[:, :k].
        Uk = Vh[:num_pca].T.astype(Xc.dtype)
        if matmul_dtype is not None:
            return project(Xc.astype(matmul_dtype), Uk.astype(matmul_dtype)).astype(X.dtype)
        return project(Xc, Uk)

    # 3) Algebraic projection: C = U[:, :k] * S[:k]  (trivial (N, k) scale).
    return (U[:, :num_pca] * S[:num_pca][None, :]).astype(X.dtype)


# ---------------------------------------------------------------------------
# Reference / test
# ---------------------------------------------------------------------------
def _reference(X, num_pca):
    """Pure-JAX reference mirroring the PyTorch module (svd of Xc^T + matmul)."""
    Xc = X - jnp.mean(X, axis=0, keepdims=True)
    U, _S, _Vh = jnp.linalg.svd(Xc.T, full_matrices=False)
    return Xc @ U[:, :num_pca]


def _assert_close_up_to_column_sign(C, C_ref, atol=1e-4, rtol=1e-4):
    # Per-column sign flips are inherent to the SVD/PCA basis.
    sign = jnp.sign(jnp.sum(C * C_ref, axis=0))
    sign = jnp.where(sign == 0, 1.0, sign)
    assert jnp.allclose(C, C_ref * sign, atol=atol, rtol=rtol), (
        float(jnp.max(jnp.abs(C - C_ref * sign))))


if __name__ == "__main__":
    key = jax.random.PRNGKey(0)
    N, D = 16, 32          # small shapes: 16 samples, 32-dim features
    num_pca = 8            # MYPCA(num_pca=8)

    X = jax.random.normal(key, (N, D), dtype=jnp.float32)
    C_ref = _reference(X, num_pca)

    # Default (fast) path: fused mean/center Pallas kernel + algebraic C = U*S.
    C = jax.block_until_ready(mypca_forward(X, num_pca))
    assert C.shape == (N, num_pca)
    _assert_close_up_to_column_sign(C, C_ref)

    # Optional torch-style path: explicit Pallas MXU projection kernel.
    C_mm = jax.block_until_ready(mypca_forward(X, num_pca, use_projection_kernel=True))
    assert C_mm.shape == (N, num_pca)
    _assert_close_up_to_column_sign(C_mm, C_ref)
    assert jnp.allclose(C, C_mm, atol=1e-4, rtol=1e-4)  # same SVD -> same signs

    print("KERNEL_OK")
</pallas_src>

<mosaic_0001>
module attributes {stable_mosaic.version = 11 : i64} {
  func.func @_mean_center_kernel(%arg0: i32, %arg1: i32, %arg2: memref<16x32xf32, #tpu.memory_space<vmem>>, %arg3: memref<16x32xf32, #tpu.memory_space<vmem>>, %arg4: memref<1x32xf32, #tpu.memory_space<vmem>>) attributes {dimension_semantics = [#tpu.dimension_semantics<arbitrary>, #tpu.dimension_semantics<arbitrary>], iteration_bounds = array<i64: 2, 1>, scalar_prefetch = 0 : i64, scratch_operands = 1 : i64, tpu.core_type = #tpu.core_type<tc>, window_params = [{transform_indices = @transform_0, window_bounds = array<i64: 16, 32>}, {transform_indices = @transform_1, window_bounds = array<i64: 16, 32>}]} {
    %c0_i32 = arith.constant 0 : i32
    %0 = arith.cmpi eq, %arg0, %c0_i32 : i32
    %c0_i32_0 = arith.constant 0 : i32
    %1 = arith.cmpi eq, %arg1, %c0_i32_0 : i32
    %2 = arith.andi %0, %1 : i1
    %3 = arith.extui %2 : i1 to i32
    %c0_i32_1 = arith.constant 0 : i32
    %4 = arith.cmpi ne, %3, %c0_i32_1 : i32
    scf.if %4 {
      %cst = arith.constant 0.000000e+00 : f32
      %16 = vector.broadcast %cst : f32 to vector<1x32xf32>
      %c0 = arith.constant 0 : index
      %c0_8 = arith.constant 0 : index
      %17 = vector.load %arg4[%c0, %c0_8] : memref<1x32xf32, #tpu.memory_space<vmem>>, vector<1x32xf32>
      tpu.vector_store %arg4[%c0, %c0_8], %16 {strides = array<i32>} : memref<1x32xf32, #tpu.memory_space<vmem>>, vector<1x32xf32>,
    } else {
    }
    %c0_i32_2 = arith.constant 0 : i32
    %5 = arith.cmpi eq, %arg0, %c0_i32_2 : i32
    %6 = arith.extui %5 : i1 to i32
    %c0_i32_3 = arith.constant 0 : i32
    %7 = arith.cmpi ne, %6, %c0_i32_3 : i32
    scf.if %7 {
      %c0 = arith.constant 0 : index
      %c0_8 = arith.constant 0 : index
      %16 = vector.load %arg2[%c0, %c0_8] : memref<16x32xf32, #tpu.memory_space<vmem>>, vector<16x32xf32>
      %c16_i32 = arith.constant 16 : i32
      %17 = arith.muli %arg1, %c16_i32 : i32
      %18 = tpu.iota {dimensions = array<i32: 0>} : vector<16x32xi32>
      %19 = vector.broadcast %17 : i32 to vector<16x32xi32>
      %20 = arith.addi %19, %18 : vector<16x32xi32>
      %c16_i32_9 = arith.constant 16 : i32
      %21 = vector.broadcast %c16_i32_9 : i32 to vector<16x32xi32>
      %22 = arith.cmpi slt, %20, %21 : vector<16x32xi32>
      %cst = arith.constant 0.000000e+00 : f32
      %23 = vector.broadcast %cst : f32 to vector<16x32xf32>
      %24 = arith.select %22, %16, %23 : vector<16x32xi1>, vector<16x32xf32>
      %c0_10 = arith.constant 0 : index
      %c0_11 = arith.constant 0 : index
      %25 = vector.load %arg4[%c0_10, %c0_11] : memref<1x32xf32, #tpu.memory_space<vmem>>, vector<1x32xf32>
      %cst_12 = arith.constant dense<0.000000e+00> : vector<32xf32>
      %26 = vector.multi_reduction <add>, %24, %cst_12 [0] : vector<16x32xf32> to vector<32xf32>
      %27 = vector.shape_cast %26 : vector<32xf32> to vector<1x32xf32>
      %28 = arith.addf %25, %27 : vector<1x32xf32>
      %c0_13 = arith.constant 0 : index
      %c0_14 = arith.constant 0 : index
      %29 = vector.load %arg4[%c0_13, %c0_14] : memref<1x32xf32, #tpu.memory_space<vmem>>, vector<1x32xf32>
      tpu.vector_store %arg4[%c0_13, %c0_14], %28 {strides = array<i32>} : memref<1x32xf32, #tpu.memory_space<vmem>>, vector<1x32xf32>,
    } else {
    }
    %c0_i32_4 = arith.constant 0 : i32
    %8 = arith.cmpi eq, %arg0, %c0_i32_4 : i32
    %c0_i32_5 = arith.constant 0 : i32
    %9 = arith.cmpi eq, %arg1, %c0_i32_5 : i32
    %10 = arith.andi %8, %9 : i1
    %11 = arith.extui %10 : i1 to i32
    %c0_i32_6 = arith.constant 0 : i32
    %12 = arith.cmpi ne, %11, %c0_i32_6 : i32
    scf.if %12 {
      %c0 = arith.constant 0 : index
      %c0_8 = arith.constant 0 : index
      %16 = vector.load %arg4[%c0, %c0_8] : memref<1x32xf32, #tpu.memory_space<vmem>>, vector<1x32xf32>
      %cst = arith.constant 6.250000e-02 : f32
      %17 = vector.broadcast %cst : f32 to vector<1x32xf32>
      %18 = arith.mulf %16, %17 : vector<1x32xf32>
      %c0_9 = arith.constant 0 : index
      %c0_10 = arith.constant 0 : index
      %19 = vector.load %arg4[%c0_9, %c0_10] : memref<1x32xf32, #tpu.memory_space<vmem>>, vector<1x32xf32>
      tpu.vector_store %arg4[%c0_9, %c0_10], %18 {strides = array<i32>} : memref<1x32xf32, #tpu.memory_space<vmem>>, vector<1x32xf32>,
    } else {
    }
    %c1_i32 = arith.constant 1 : i32
    %13 = arith.cmpi eq, %arg0, %c1_i32 : i32
    %14 = arith.extui %13 : i1 to i32
    %c0_i32_7 = arith.constant 0 : i32
    %15 = arith.cmpi ne, %14, %c0_i32_7 : i32
    scf.if %15 {
      %c0 = arith.constant 0 : index
      %c0_8 = arith.constant 0 : index
      %16 = vector.load %arg2[%c0, %c0_8] : memref<16x32xf32, #tpu.memory_space<vmem>>, vector<16x32xf32>
      %c0_9 = arith.constant 0 : index
      %c0_10 = arith.constant 0 : index
      %17 = vector.load %arg4[%c0_9, %c0_10] : memref<1x32xf32, #tpu.memory_space<vmem>>, vector<1x32xf32>
      %18 = vector.broadcast %17 : vector<1x32xf32> to vector<16x32xf32>
      %19 = arith.subf %16, %18 : vector<16x32xf32>
      %c0_11 = arith.constant 0 : index
      %c0_12 = arith.constant 0 : index
      %20 = vector.load %arg3[%c0_11, %c0_12] : memref<16x32xf32, #tpu.memory_space<vmem>>, vector<16x32xf32>
      tpu.vector_store %arg3[%c0_11, %c0_12], %19 {strides = array<i32>} : memref<16x32xf32, #tpu.memory_space<vmem>>, vector<16x32xf32>,
    } else {
    }
    return
  }
  func.func @transform_0(%arg0: i32, %arg1: i32) -> (i32, i32) {
    %c0_i32 = arith.constant 0 : i32
    %c0_i32_0 = arith.constant 0 : i32
    return %arg1, %c0_i32 : i32, i32
  }
  func.func @transform_1(%arg0: i32, %arg1: i32) -> (i32, i32) {
    %0 = arith.muli %arg1, %arg0 : i32
    %c0_i32 = arith.constant 0 : i32
    %c0_i32_0 = arith.constant 0 : i32
    return %0, %c0_i32 : i32, i32
  }
}

</mosaic_0001>

<llo_original>
// kernel: tpu_custom_call.1
$region0: #{tpu_custom_call.1}
  #allocation0 [shape = 'u32[]', space=smem, size = 0x4, offset = 0x4, fixed_abs, tag = 'smem constant byte address 0x4 - core index']
  #allocation1 [shape = 'u32[72,128]{1,0:T(1,128)}', space=vmem, size = 0x9000, scoped, tag = 'internal scratch']
  #allocation2 [shape = 'f32[1,32]{1,0:T(1,128)}', space=vmem, size = 0x200, scoped, tag = 'scratch operand']
  %s0 = inlined_call_operand.hbm [shape: f32[16,32], index: 0, kind: input, shape index: {}]
  %s1 = inlined_call_operand.hbm [shape: f32[16,32], index: 1, kind: output, shape index: {}]
  %s2 = sld [smem:[#allocation0]]
  $region57: #{tpu_custom_call.1} parent=0
    _
  %s4 = ssub.s32 1, %s2
  %s5 = scalar_select 0, %s4, %s2
  $region1: #{tpu_custom_call.1} parent=0
    #allocation3 [shape = 'u8[8192]{0}', space=vmem, size = 0x2000, scoped, tag = 'input window, operand 0, single buffered']
    #allocation4 [shape = 's32[2]{0}', space=sflag, size = 0x8, scoped, tag = 'scoped memory for tpu_custom_call.1']
    #allocation5 [shape = 's32[2]{0}', space=sflag, size = 0x8, scoped, tag = 'scoped memory for tpu_custom_call.1']
    #allocation6 [shape = 'u8[16384]{0}', space=vmem, size = 0x4000, scoped, tag = 'output window, operand 0']
    %6 = vsyncpa [#allocation4], 0
    %7 = vsyncpa [#allocation5], 0
    %s8 = scalar_lea.sflag [#allocation5], 1
    %9 = vsyncpa %s8, 0
    loop: start=0, step=1, limit=4
    $region2: #{tpu_custom_call.1} parent=1 // loop_pre_header
      _
    $region3: #{tpu_custom_call.1} parent=1 // loop_header
      %s11 = sphi 0, %s15
      %p12 = scmp.ge.s32.totalorder %s11, 4
      %s18 = sphi 0, %s30
      %s19 = sphi 0, %s26
      %s20 = sphi 0, %s18
      %s21 = sphi 0, %s19
      %s22 = sphi 0, %s20
      %s23 = sphi 0, %s21
      %s33 = sphi 0, %s35
      %s36 = sphi 0, %s33
      %s37 = sphi 0, %s36
      %s53 = sphi 0, %s37
      %s61 = sphi 0, %s63
      %s64 = sphi 0, %s61
      %s65 = sphi 0, %s64
      %s81 = sphi 0, %s65
    $region4: #{tpu_custom_call.1} parent=1 // loop_header_branch
      %14 = sbr.rel (%p12) target = $region8
    $region5: #{tpu_custom_call.1} parent=1 // loop_body
      %s16 = ssub.s32 %s11, 1
      %s17 = ssub.s32 %s11, 2
      %s24 = sadd.s32 1, %s19
      %p25 = scmp.ge.s32.totalorder %s24, 1
      %s26 = scalar_select %p25, 0, %s24
      %s27 = sadd.s32 1, %s18
      %s28 = scalar_select %p25, %s27, %s18
      %p29 = scmp.ge.s32.totalorder %s28, 2
      %s30 = scalar_select %p29, 0, %s28
      %s31 = ssub.s32 %s19, %s26
      %p32 = scmp.eq.s32.totalorder %s31, 0
      %s34 = sadd.s32 %s33, 1
      %s35 = scalar_select %p32, %s33, %s34
      %p38 = pneg %p32
      %p39 = scmp.eq.s32.totalorder %s11, 1
      %p40 = por %p38, %p39
      %p41 = scmp.ne.s32.totalorder %s33, %s36
      %p42 = scmp.eq.s32.totalorder %s11, 0
      %p43 = por %p41, %p42
      %p44 = scmp.ne.s32.totalorder %s33, %s36
      %p45 = scmp.eq.s32.totalorder %s16, 1
      %p46 = por %p44, %p45
      %p47 = scmp.ne.s32.totalorder %s36, %s37
      %p48 = scmp.eq.s32.totalorder %s16, 0
      %p49 = por %p47, %p48
      %p50 = scmp.ne.s32.totalorder %s36, %s37
      %p51 = scmp.eq.s32.totalorder %s17, 1
      %p52 = por %p50, %p51
      %p54 = scmp.ne.s32.totalorder %s37, %s53
      %p55 = scmp.eq.s32.totalorder %s17, 0
      %p56 = por %p54, %p55
      %s57 = smul.u32 %s19, %s18
      %s58 = smul.u32 %s26, %s30
      %s59 = ssub.s32 %s57, %s58
      %p60 = scmp.eq.s32.totalorder %s59, 0
      %s62 = sadd.s32 %s61, 1
      %s63 = scalar_select %p60, %s61, %s62
      %p66 = pneg %p60
      %p67 = scmp.eq.s32.totalorder %s11, 1
      %p68 = por %p66, %p67
      %p69 = scmp.ne.s32.totalorder %s61, %s64
      %p70 = scmp.eq.s32.totalorder %s11, 0
      %p71 = por %p69, %p70
      %p72 = scmp.ne.s32.totalorder %s61, %s64
      %p73 = scmp.eq.s32.totalorder %s16, 1
      %p74 = por %p72, %p73
      %p75 = scmp.ne.s32.totalorder %s64, %s65
      %p76 = scmp.eq.s32.totalorder %s16, 0
      %p77 = por %p75, %p76
      %p78 = scmp.ne.s32.totalorder %s64, %s65
      %p79 = scmp.eq.s32.totalorder %s17, 1
      %p80 = por %p78, %p79
      %p82 = scmp.ne.s32.totalorder %s65, %s81
      %p83 = scmp.eq.s32.totalorder %s17, 0
      %p84 = por %p82, %p83
      %p85 = scmp.le.s32.totalorder 1, %s11
      %p86 = scmp.lt.s32.totalorder %s11, 3
      %p87 = pnand %p85, %p86
      %p88 = pneg %p87
      // Predicated region
      $region9: #{tpu_custom_call.1} parent=5 // pred_check
        _
      $region10: #{tpu_custom_call.1} parent=5 // pred_check_branch
        %90 = sbr.rel (%p87) target = $region12
      $region11: #{tpu_custom_call.1} parent=5 // pred_region
        %s91 = ssub.s32 %s11, 1
        // Predicated region
        $region13: #{tpu_custom_call.1} parent=11 // pred_check
          %p92 = pneg %p49
        $region14: #{tpu_custom_call.1} parent=11 // pred_check_branch
          %94 = sbr.rel (%p92) target = $region16
        $region15: #{tpu_custom_call.1} parent=11 // pred_region
          %s95 = smul.u32 2, %s21
          %97 = vsyncadd [#allocation4], 0
          %s98 = smul.addr %s95, 8
          %s99 = scalar_lea.hbm %s0, %s98
          %s100 = sshll.u32 %s99, 4
          %s101 = int_to_ptr.hbm [resolvable:$true] %s100
          %s102 = sshll.u32 [#allocation3], 4
          %s103 = int_to_ptr.vmem [resolvable:$true] %s102
          %108 = dma.hbm_to_vmem [thread:$0]  %s101, 256, %s103, [#allocation4], 128, 128, 8
        $region16: #{tpu_custom_call.1} parent=11 // pred_fallthru
          _
      $region12: #{tpu_custom_call.1} parent=5 // pred_fallthru
        _
      %p109 = scmp.lt.s32.totalorder %s11, 2
      // Predicated region
      $region17: #{tpu_custom_call.1} parent=5 // pred_check
        %p110 = pneg %p109
      $region18: #{tpu_custom_call.1} parent=5 // pred_check_branch
        %112 = sbr.rel (%p110) target = $region20
      $region19: #{tpu_custom_call.1} parent=5 // pred_region
        _
      $region20: #{tpu_custom_call.1} parent=5 // pred_fallthru
        _
      %p113 = scmp.le.s32.totalorder 1, %s11
      %p114 = scmp.lt.s32.totalorder %s11, 3
      %p115 = pnand %p113, %p114
      %p116 = pneg %p115
      // Predicated region
      $region21: #{tpu_custom_call.1} parent=5 // pred_check
        _
      $region22: #{tpu_custom_call.1} parent=5 // pred_check_branch
        %118 = sbr.rel (%p115) target = $region24
      $region23: #{tpu_custom_call.1} parent=5 // pred_region
        %s119 = ssub.s32 %s11, 1
        // Predicated region
        $region25: #{tpu_custom_call.1} parent=23 // pred_check
          %p120 = pneg %p49
        $region26: #{tpu_custom_call.1} parent=23 // pred_check_branch
          %122 = sbr.rel (%p120) target = $region28
        $region27: #{tpu_custom_call.1} parent=23 // pred_region
          %124 = dma.done [#allocation4], 256
        $region28: #{tpu_custom_call.1} parent=23 // pred_fallthru
          _
        %p125 = pneg %p49
        %p126 = pneg %p46
        %p127 = pneg %p77
        %p128 = pneg %p74
        %s129 = sand.u32 %s64, 1
        %s130 = scalar_lea.sflag [#allocation5], %s129
        %s131 = sand.u32 %s64, 1
        %s132 = smul.addr %s131, 16
        %s133 = scalar_lea.vmem [#allocation6], %s132
        %s134 = smul.u32 2, %s21
        %s135 = smul.u32 %s21, %s20
        %s136 = smul.u32 2, %s135
        %p137 = scmp.eq.s32.totalorder %s20, 0
        %p138 = scmp.eq.s32.totalorder %s21, 0
        %p139 = pnand %p137, %p138
        %p140 = pneg %p139
        // Predicated region
        $region29: #{tpu_custom_call.1} parent=23 // pred_check
          _
        $region30: #{tpu_custom_call.1} parent=23 // pred_check_branch
          %142 = sbr.rel (%p139) target = $region32
        $region31: #{tpu_custom_call.1} parent=23 // pred_region
          %vm143 = vcmask 253952
          %144 = vst.msk [vmem:[#allocation2] sm:$0x1] %vm143, 0.0
        $region32: #{tpu_custom_call.1} parent=23 // pred_fallthru
          _
        // Predicated region
        $region33: #{tpu_custom_call.1} parent=23 // pred_check
          %p145 = pneg %p137
        $region34: #{tpu_custom_call.1} parent=23 // pred_check_branch
          %147 = sbr.rel (%p145) target = $region36
        $region35: #{tpu_custom_call.1} parent=23 // pred_region
          %v148 = vld [vmem:[#allocation3] sm:$0xff]
          %v149 = vld [vmem:[#allocation3 + $0x8] sm:$0xff]
          %s150 = smul.u32 %s21, 16
          %v151 = vlaneseq
          %v152 = vshrl.u32 %v151, 7
          %v153 = vadd.s32 %v152, 8
          %v154 = vstv %s150
          %v155 = vadd.s32 %v154, %v152
          %v156 = vadd.s32 %v154, %v153
          %vm157 = vcmp.lt.s32.totalorder %v155, 16
          %vm158 = vcmp.lt.s32.totalorder %v156, 16
          %v159 = vsel %vm157, %v148, 0.0
          %v160 = vsel %vm158, %v149, 0.0
          %v161 = vld [vmem:[#allocation2] sm:$0x1]
          %vm162 = vcmask 261120
          %v163 = vsel %vm162, %v159, 0.0
          %v164 = vsel %vm162, %v160, 0.0
          %v165 = vadd.f32 %v163, %v164
          %v166 = vrot.slane %v165, 4
          %v167 = vadd.f32 %v165, %v166
          %v168 = vrot.slane %v167, 2
          %v169 = vadd.f32 %v167, %v168
          %v170 = vrot.slane %v169, 1
          %v171 = vadd.f32 %v169, %v170
          %v172 = vadd.f32 %v161, %v171
          %vm173 = vcmask 253952
          %174 = vst.msk [vmem:[#allocation2] sm:$0x1] %vm173, %v172
        $region36: #{tpu_custom_call.1} parent=23 // pred_fallthru
          _
        // Predicated region
        $region37: #{tpu_custom_call.1} parent=23 // pred_check
          _
        $region38: #{tpu_custom_call.1} parent=23 // pred_check_branch
          %176 = sbr.rel (%p139) target = $region40
        $region39: #{tpu_custom_call.1} parent=23 // pred_region
          %v177 = vld [vmem:[#allocation2] sm:$0x1]
          %v178 = vmul.f32 %v177, 0.0625
          %vm179 = vcmask 253952
          %180 = vst.msk [vmem:[#allocation2] sm:$0x1] %vm179, %v178
        $region40: #{tpu_custom_call.1} parent=23 // pred_fallthru
          _
        %p181 = scmp.eq.s32.totalorder %s20, 1
        // Predicated region
        $region41: #{tpu_custom_call.1} parent=23 // pred_check
          %p182 = pneg %p181
        $region42: #{tpu_custom_call.1} parent=23 // pred_check_branch
          %184 = sbr.rel (%p182) target = $region44
        $region43: #{tpu_custom_call.1} parent=23 // pred_region
          %v185 = vld [vmem:[#allocation3] sm:$0xff]
          %v186 = vld [vmem:[#allocation3 + $0x8] sm:$0xff]
          %v187 = vld [vmem:[#allocation2] sm:$0x1]
          %v189 = vperm.slane %v187, 0
          %v191 = vsub.f32 %v185, %v189
          %v192 = vsub.f32 %v186, %v189
          %vm193 = vcmask 261120
          %194 = vst.msk [vmem:[%s133] sm:$0xff] %vm193, %v191
          %195 = vst.msk [vmem:[%s133 + $0x8] sm:$0xff] %vm193, %v192
        $region44: #{tpu_custom_call.1} parent=23 // pred_fallthru
          _
        %s196 = sand.u32 %s64, 1
        %s197 = scalar_lea.sflag [#allocation5], %s196
        %s198 = sand.u32 %s64, 1
        %s199 = smul.addr %s198, 16
        %s200 = scalar_lea.vmem [#allocation6], %s199
        // Predicated region
        $region45: #{tpu_custom_call.1} parent=23 // pred_check
          %p201 = pneg %p74
        $region46: #{tpu_custom_call.1} parent=23 // pred_check_branch
          %203 = sbr.rel (%p201) target = $region48
        $region47: #{tpu_custom_call.1} parent=23 // pred_region
          %s204 = smul.u32 %s21, %s20
          %s205 = smul.u32 2, %s204
          %207 = vsyncadd %s197, 0
          %s208 = smul.addr %s205, 8
          %s209 = scalar_lea.hbm %s1, %s208
          %s210 = sshll.u32 %s200, 4
          %s211 = int_to_ptr.vmem [resolvable:$true] %s210
          %s212 = sshll.u32 %s209, 4
          %s213 = int_to_ptr.hbm [resolvable:$true] %s212
          %218 = dma.vmem_to_hbm [thread:$0]  %s211, 256, %s213, %s197, 128, 128, 8
        $region48: #{tpu_custom_call.1} parent=23 // pred_fallthru
          _
      $region24: #{tpu_custom_call.1} parent=5 // pred_fallthru
        _
      %p219 = scmp.le.s32.totalorder 2, %s11
      // Predicated region
      $region49: #{tpu_custom_call.1} parent=5 // pred_check
        %p220 = pneg %p219
      $region50: #{tpu_custom_call.1} parent=5 // pred_check_branch
        %222 = sbr.rel (%p220) target = $region52
      $region51: #{tpu_custom_call.1} parent=5 // pred_region
        %s223 = ssub.s32 %s11, 2
        // Predicated region
        $region53: #{tpu_custom_call.1} parent=51 // pred_check
          %p224 = pneg %p80
        $region54: #{tpu_custom_call.1} parent=51 // pred_check_branch
          %226 = sbr.rel (%p224) target = $region56
        $region55: #{tpu_custom_call.1} parent=51 // pred_region
          %s227 = sand.u32 %s65, 1
          %s228 = scalar_lea.sflag [#allocation5], %s227
          %s229 = sand.u32 %s65, 1
          %s230 = smul.addr %s229, 16
          %s231 = scalar_lea.vmem [#allocation6], %s230
          %233 = dma.done %s228, 256
        $region56: #{tpu_custom_call.1} parent=51 // pred_fallthru
          _
      $region52: #{tpu_custom_call.1} parent=5 // pred_fallthru
        _
    $region6: #{tpu_custom_call.1} parent=1 // loop_footer
      %s15 = sadd.s32 1, %s11
    $region7: #{tpu_custom_call.1} parent=1 // loop_footer_branch
      %10 = sbr.rel target = $region3
    $region8: #{tpu_custom_call.1} parent=1 // loop_exit
      _
    %234 = vsyncpa [#allocation4], 1
    %s235 = scalar_lea.sflag [#allocation4], 1
    %236 = vsyncpa %s235, 1
    %237 = vsyncpa [#allocation5], 1
    %s238 = scalar_lea.sflag [#allocation5], 1
    %239 = vsyncpa %s238, 1

</llo_original>
